<compile_context>
chip_gen: v7x
topology: tpu7x:2x2x1
jax: 0.10.0
libtpu: 0.0.40
codegen_flags: <defaults>
</compile_context>

<pallas_src>
import functools
import math

import jax
import jax.numpy as jnp
from jax import lax
from jax.experimental import pallas as pl
from jax.experimental.pallas import tpu as pltpu


def _qkv_attention_kernel(q_ref, k_ref, v_ref, o_ref, *, ch, t_real, t_pad):
    """One grid step: `block_b` heads x one query tile.

    q_ref: (Bt, Tq, ch)   k_ref, v_ref: (Bt, ch, Tp)   o_ref: (Bt, ch, Tq)
    """
    # PyTorch applies 1/ch**0.25 to both q and k; fold both into q:
    # (q*s)·(k*s) == (q*s*s)·k.  Stays in the native operand dtype for the MXU.
    q = q_ref[...] * (1.0 / math.sqrt(ch))

    # w[b, t, s] = sum_c q[b, t, c] * k[b, c, s]   (MXU-native A·B per batch)
    w = lax.dot_general(
        q, k_ref[...],
        dimension_numbers=(((2,), (1,)), ((0,), (0,))),
        preferred_element_type=jnp.float32)               # (Bt, Tq, Tp) f32

    # Mask zero-padded key columns so they contribute nothing to the softmax.
    if t_real < t_pad:
        col = lax.broadcasted_iota(jnp.int32, w.shape, dimension=2)
        w = jnp.where(col < t_real, w, jnp.float32(-1e30))

    # Numerically-stable softmax over keys in f32 (like torch.softmax(w.float())),
    # with the normalization deferred to the (ch, Tq) result below.
    m = jnp.max(w, axis=-1, keepdims=True)                 # (Bt, Tq, 1)
    e = jnp.exp(w - m)                                     # (Bt, Tq, Tp) f32
    denom = jnp.sum(e, axis=-1)                            # (Bt, Tq)

    # a_unnorm[b, c, t] = sum_s v[b, c, s] * e[b, t, s]   (A·B^T per batch)
    a = lax.dot_general(
        v_ref[...], e.astype(v_ref.dtype),
        dimension_numbers=(((2,), (2,)), ((0,), (0,))),
        preferred_element_type=jnp.float32)                # (Bt, ch, Tq) f32

    # EUP approximate reciprocal + one Newton step (~f32 accurate), then one
    # O(ch*Tq) broadcast multiply instead of dividing the (Tq, Tp) matrix.
    inv = pl.reciprocal(denom, approx=True)
    inv = inv * (2.0 - denom * inv)
    a = a * inv[:, None, :]

    o_ref[...] = a.astype(o_ref.dtype)

    # TODO(synk): optional `mask` / `rel_pos` args of the PyTorch module are
    # not implemented (they are None in the default forward path).


def _vmem_plan():
    """(vmem_limit_bytes, block-selection budget) for the current TPU gen."""
    cap = 64 * 1024 * 1024                       # conservative (v7x per-core)
    try:
        info = pltpu.get_tpu_info()
        for attr in ("vmem_capacity_bytes", "vmem_bytes"):
            v = getattr(info, attr, None)
            if isinstance(v, int) and v > 0:
                cap = v
                break
    except Exception:
        pass
    # Leave headroom for Mosaic internal scratch + the compiler's own buffers.
    limit = min(int(cap * 0.80), cap - (16 << 20))
    limit = max(limit, 32 << 20)
    budget = int(limit * 0.70)
    return limit, budget


def _per_bb_vmem_bytes(ch, t_pad, t_q, itemsize):
    """Per-(batch*head) VMEM footprint estimate for one grid step."""
    pipelined = 2 * (t_q * ch * itemsize          # q tile (double-buffered)
                     + 2 * ch * t_pad * itemsize  # k + v tiles
                     + ch * t_q * itemsize)       # out tile
    logits = 2 * t_q * t_pad * 4                  # w + e in f32
    e_cast = t_q * t_pad * itemsize               # e cast to the matmul dtype
    misc = 3 * ch * t_q * 4                       # scaled q / f32 result slack
    return int(1.3 * (pipelined + logits + e_cast + misc))


def _choose_tq(t_pad, ch, itemsize, budget):
    """Query-tile length: multiple of 128 dividing t_pad, sized to the budget."""
    if t_pad <= 512:
        cands = [t_pad]
    else:
        cands = [t for t in (512, 384, 256, 128) if t_pad % t == 0] or [128]
    for tq in cands:
        if _per_bb_vmem_bytes(ch, t_pad, tq, itemsize) <= budget:
            return tq
    # TODO(synk): for extreme T where even Tq=128 at block_b=1 overflows the
    # budget, a KV-block grid axis with online softmax would be needed.
    return cands[-1]


def _choose_block_b(B, per_bb_bytes, budget):
    """Largest divisor of B that fits the budget; prefer an even grid length
    (balanced across v7x's two TensorCores), then >= 2 steps, then anything."""
    cap = max(1, budget // max(per_bb_bytes, 1))
    fits = [d for d in range(1, B + 1) if B % d == 0 and d <= cap]
    even = [d for d in fits if (B // d) % 2 == 0]
    multi = [d for d in fits if (B // d) >= 2]
    if even:
        return max(even)
    if multi:
        return max(multi)
    return max(fits)


def qkv_attention_legacy(qkv, n_heads, *, block_b=None, t_q=None):
    """qkv: [N, H*3*C, T] -> [N, H*C, T] (matches QKVAttentionLegacy.forward)."""
    bs, width, length = qkv.shape
    assert width % (3 * n_heads) == 0
    ch = width // (3 * n_heads)
    B = bs * n_heads
    itemsize = jnp.dtype(qkv.dtype).itemsize

    # Split into q/k/v and lay q out (B, T, ch) — one cheap XLA-side transpose
    # in HBM instead of a per-step in-kernel relayout of the q tile.
    qkv_r = qkv.reshape(B, 3, ch, length)
    q_t = jnp.swapaxes(qkv_r[:, 0], 1, 2)          # (B, T, ch)
    k = qkv_r[:, 1]                                # (B, ch, T)
    v = qkv_r[:, 2]                                # (B, ch, T)

    # Pad T up to a multiple of 128: lane-dense (unmasked) stores and
    # (8,128)-aligned logits tiles.  Padded keys are masked in the kernel.
    t_pad = max(128, ((length + 127) // 128) * 128)
    if t_pad != length:
        q_t = jnp.pad(q_t, ((0, 0), (0, t_pad - length), (0, 0)))
        k = jnp.pad(k, ((0, 0), (0, 0), (0, t_pad - length)))
        v = jnp.pad(v, ((0, 0), (0, 0), (0, t_pad - length)))

    vmem_limit, budget = _vmem_plan()
    if t_q is None:
        t_q = _choose_tq(t_pad, ch, itemsize, budget)
    assert t_pad % t_q == 0
    if block_b is None:
        block_b = _choose_block_b(B, _per_bb_vmem_bytes(ch, t_pad, t_q, itemsize),
                                  budget)
    assert B % block_b == 0

    kernel = functools.partial(_qkv_attention_kernel, ch=ch,
                               t_real=length, t_pad=t_pad)

    cost = pl.CostEstimate(
        flops=4 * B * ch * t_pad * t_pad,
        transcendentals=B * t_pad * t_pad,
        bytes_accessed=(q_t.size + k.size + v.size + B * ch * t_pad) * itemsize)

    out = pl.pallas_call(
        kernel,
        out_shape=jax.ShapeDtypeStruct((B, ch, t_pad), qkv.dtype),
        grid_spec=pltpu.PrefetchScalarGridSpec(
            num_scalar_prefetch=0,
            grid=(B // block_b, t_pad // t_q),
            in_specs=[
                # q: per-head block, per-query-tile slice.
                pl.BlockSpec((block_b, t_q, ch), lambda b, qi: (b, qi, 0)),
                # k / v: full (padded) key axis, independent of the query tile
                # index -> reused (not re-DMA'd) across query tiles.
                pl.BlockSpec((block_b, ch, t_pad), lambda b, qi: (b, 0, 0)),
                pl.BlockSpec((block_b, ch, t_pad), lambda b, qi: (b, 0, 0)),
            ],
            out_specs=pl.BlockSpec((block_b, ch, t_q), lambda b, qi: (b, 0, qi)),
        ),
        compiler_params=pltpu.CompilerParams(
            dimension_semantics=("parallel", "arbitrary"),
            vmem_limit_bytes=vmem_limit),
        cost_estimate=cost,
    )(q_t, k, v)

    out = out[:, :, :length]
    return out.reshape(bs, n_heads * ch, length)


def _reference(qkv, n_heads):
    """Pure-JAX reference mirroring the PyTorch forward (HIGHEST-precision dots
    so the comparison is against ~f32-exact matmuls, like the kernel's MXU
    accumulation)."""
    bs, width, length = qkv.shape
    ch = width // (3 * n_heads)
    qkv_r = qkv.reshape(bs * n_heads, 3 * ch, length)
    q, k, v = qkv_r[:, :ch], qkv_r[:, ch:2 * ch], qkv_r[:, 2 * ch:]
    scale = 1.0 / math.sqrt(math.sqrt(ch))
    w = jnp.einsum('bct,bcs->bts', q * scale, k * scale,
                   precision=lax.Precision.HIGHEST)
    w = jax.nn.softmax(w.astype(jnp.float32), axis=-1).astype(w.dtype)
    a = jnp.einsum('bts,bcs->bct', w, v, precision=lax.Precision.HIGHEST)
    return a.reshape(bs, -1, length)


if __name__ == "__main__":
    key = jax.random.PRNGKey(0)
    n_heads = 2
    ch = 8
    N, T = 2, 16
    width = n_heads * 3 * ch  # 48

    qkv = jax.random.normal(key, (N, width, T), dtype=jnp.float32)

    out = qkv_attention_legacy(qkv, n_heads)
    out = jax.block_until_ready(out)

    ref = _reference(qkv, n_heads)
    assert out.shape == (N, n_heads * ch, T)
    assert jnp.allclose(out, ref, atol=2e-4, rtol=2e-4), (
        float(jnp.max(jnp.abs(out - ref))))

    print("KERNEL_OK")
</pallas_src>

<mosaic_0001>
module attributes {stable_mosaic.version = 11 : i64} {
  func.func @_qkv_attention_kernel(%arg0: i32, %arg1: i32, %arg2: memref<2x128x8xf32, #tpu.memory_space<vmem>>, %arg3: memref<2x8x128xf32, #tpu.memory_space<vmem>>, %arg4: memref<2x8x128xf32, #tpu.memory_space<vmem>>, %arg5: memref<2x8x128xf32, #tpu.memory_space<vmem>>) attributes {dimension_semantics = [#tpu.dimension_semantics<parallel>, #tpu.dimension_semantics<arbitrary>], iteration_bounds = array<i64: 2, 1>, scalar_prefetch = 0 : i64, scratch_operands = 0 : i64, tpu.core_type = #tpu.core_type<tc>, window_params = [{transform_indices = @transform_0, window_bounds = array<i64: 2, 128, 8>}, {transform_indices = @transform_1, window_bounds = array<i64: 2, 8, 128>}, {transform_indices = @transform_2, window_bounds = array<i64: 2, 8, 128>}, {transform_indices = @transform_3, window_bounds = array<i64: 2, 8, 128>}]} {
    %c0 = arith.constant 0 : index
    %c0_0 = arith.constant 0 : index
    %c0_1 = arith.constant 0 : index
    %0 = vector.load %arg2[%c0, %c0_0, %c0_1] : memref<2x128x8xf32, #tpu.memory_space<vmem>>, vector<2x128x8xf32>
    %cst = arith.constant 0.353553385 : f32
    %1 = vector.broadcast %cst : f32 to vector<2x128x8xf32>
    %2 = arith.mulf %0, %1 : vector<2x128x8xf32>
    %c0_2 = arith.constant 0 : index
    %c0_3 = arith.constant 0 : index
    %c0_4 = arith.constant 0 : index
    %3 = vector.load %arg3[%c0_2, %c0_3, %c0_4] : memref<2x8x128xf32, #tpu.memory_space<vmem>>, vector<2x8x128xf32>
    %cst_5 = arith.constant dense<0.000000e+00> : vector<2x128x128xf32>
    %4 = tpu.matmul %2, %3, %cst_5 {dimension_numbers = #tpu.dot_dimension_numbers<[2], [1], [1], [2], [0, 0, 0, 1, 1, 2], [0], [0]>} : vector<2x128x8xf32>, vector<2x8x128xf32>, vector<2x128x128xf32> -> vector<2x128x128xf32>
    %5 = tpu.iota {dimensions = array<i32: 2>} : vector<2x128x128xi32>
    %c16_i32 = arith.constant 16 : i32
    %6 = vector.broadcast %c16_i32 : i32 to vector<2x128x128xi32>
    %7 = arith.cmpi slt, %5, %6 : vector<2x128x128xi32>
    %cst_6 = arith.constant -1.000000e+30 : f32
    %8 = vector.broadcast %cst_6 : f32 to vector<2x128x128xf32>
    %9 = arith.select %7, %4, %8 : vector<2x128x128xi1>, vector<2x128x128xf32>
    %cst_7 = arith.constant dense<0xFF800000> : vector<2x128xf32>
    %10 = vector.multi_reduction <maximumf>, %9, %cst_7 [2] : vector<2x128x128xf32> to vector<2x128xf32>
    %11 = vector.shape_cast %10 : vector<2x128xf32> to vector<2x128x1xf32>
    %12 = vector.broadcast %11 : vector<2x128x1xf32> to vector<2x128x128xf32>
    %13 = arith.subf %9, %12 : vector<2x128x128xf32>
    %14 = math.exp %13 : vector<2x128x128xf32>
    %cst_8 = arith.constant dense<0.000000e+00> : vector<2x128xf32>
    %15 = vector.multi_reduction <add>, %14, %cst_8 [2] : vector<2x128x128xf32> to vector<2x128xf32>
    %c0_9 = arith.constant 0 : index
    %c0_10 = arith.constant 0 : index
    %c0_11 = arith.constant 0 : index
    %16 = vector.load %arg4[%c0_9, %c0_10, %c0_11] : memref<2x8x128xf32, #tpu.memory_space<vmem>>, vector<2x8x128xf32>
    %cst_12 = arith.constant dense<0.000000e+00> : vector<2x8x128xf32>
    %17 = tpu.matmul %16, %14, %cst_12 {dimension_numbers = #tpu.dot_dimension_numbers<[2], [2], [1], [1], [0, 0, 0, 1, 1, 1], [0], [0]>} : vector<2x8x128xf32>, vector<2x128x128xf32>, vector<2x8x128xf32> -> vector<2x8x128xf32>
    %18 = tpu.reciprocal %15 {approx = true} : vector<2x128xf32> -> vector<2x128xf32>
    %19 = arith.mulf %15, %18 : vector<2x128xf32>
    %cst_13 = arith.constant 2.000000e+00 : f32
    %20 = vector.broadcast %cst_13 : f32 to vector<2x128xf32>
    %21 = arith.subf %20, %19 : vector<2x128xf32>
    %22 = arith.mulf %18, %21 : vector<2x128xf32>
    %23 = vector.shape_cast %22 : vector<2x128xf32> to vector<2x1x128xf32>
    %24 = vector.broadcast %23 : vector<2x1x128xf32> to vector<2x8x128xf32>
    %25 = arith.mulf %17, %24 : vector<2x8x128xf32>
    %c0_14 = arith.constant 0 : index
    %c0_15 = arith.constant 0 : index
    %c0_16 = arith.constant 0 : index
    %26 = vector.load %arg5[%c0_14, %c0_15, %c0_16] : memref<2x8x128xf32, #tpu.memory_space<vmem>>, vector<2x8x128xf32>
    tpu.vector_store %arg5[%c0_14, %c0_15, %c0_16], %25 {strides = array<i32>} : memref<2x8x128xf32, #tpu.memory_space<vmem>>, vector<2x8x128xf32>,
    return
  }
  func.func @transform_0(%arg0: i32, %arg1: i32) -> (i32, i32, i32) {
    %c0_i32 = arith.constant 0 : i32
    %c0_i32_0 = arith.constant 0 : i32
    return %arg0, %arg1, %c0_i32 : i32, i32, i32
  }
  func.func @transform_1(%arg0: i32, %arg1: i32) -> (i32, i32, i32) {
    %c0_i32 = arith.constant 0 : i32
    %c0_i32_0 = arith.constant 0 : i32
    %c0_i32_1 = arith.constant 0 : i32
    return %arg0, %c0_i32, %c0_i32_0 : i32, i32, i32
  }
  func.func @transform_2(%arg0: i32, %arg1: i32) -> (i32, i32, i32) {
    %c0_i32 = arith.constant 0 : i32
    %c0_i32_0 = arith.constant 0 : i32
    %c0_i32_1 = arith.constant 0 : i32
    return %arg0, %c0_i32, %c0_i32_0 : i32, i32, i32
  }
  func.func @transform_3(%arg0: i32, %arg1: i32) -> (i32, i32, i32) {
    %c0_i32 = arith.constant 0 : i32
    %c0_i32_0 = arith.constant 0 : i32
    return %arg0, %c0_i32, %arg1 : i32, i32, i32
  }
}

</mosaic_0001>

<llo_original>
// kernel: tpu_custom_call.1
$region0: #{tpu_custom_call.1}
  #allocation0 [shape = 'u32[]', space=smem, size = 0x4, offset = 0x4, fixed_abs, tag = 'smem constant byte address 0x4 - core index']
  #allocation1 [shape = 'u32[144,128]{1,0:T(1,128)}', space=vmem, size = 0x12000, scoped, tag = 'internal scratch']
  %s0 = inlined_call_operand.vmem [shape: f32[4,128,8], index: 0, kind: input, shape index: {}]
  %s1 = inlined_call_operand.vmem [shape: f32[4,8,128], index: 1, kind: input, shape index: {}]
  %s2 = inlined_call_operand.vmem [shape: f32[4,8,128], index: 2, kind: input, shape index: {}]
  %s3 = inlined_call_operand.hbm [shape: f32[4,8,128], index: 3, kind: output, shape index: {}]
  %s4 = sld [smem:[#allocation0]]
  $region45: #{tpu_custom_call.1} parent=0
    _
  %s6 = ssub.s32 1, %s4
  %s7 = scalar_select 0, %s6, %s4
  $region1: #{tpu_custom_call.1} parent=0
    #allocation2 [shape = 'u8[16384]{0}', space=vmem, size = 0x4000, scoped, tag = 'output window, operand 0']
    #allocation3 [shape = 's32[2]{0}', space=sflag, size = 0x8, scoped, tag = 'scoped memory for tpu_custom_call.1']
    %8 = vsyncpa [#allocation3], 0
    %s9 = scalar_lea.sflag [#allocation3], 1
    %10 = vsyncpa %s9, 0
    loop: start=0, step=1, limit=4
    $region2: #{tpu_custom_call.1} parent=1 // loop_pre_header
      _
    $region3: #{tpu_custom_call.1} parent=1 // loop_header
      %s12 = sphi 0, %s16
      %p13 = scmp.ge.s32.totalorder %s12, 4
      %s19 = sphi 0, %s31
      %s20 = sphi 0, %s27
      %s21 = sphi 0, %s19
      %s22 = sphi 0, %s20
      %s23 = sphi 0, %s21
      %s24 = sphi 0, %s22
      %s36 = sphi 0, %s38
      %s39 = sphi 0, %s36
      %s40 = sphi 0, %s39
      %s56 = sphi 0, %s40
      %s62 = sphi 0, %s64
      %s65 = sphi 0, %s62
      %s66 = sphi 0, %s65
      %s82 = sphi 0, %s66
      %s88 = sphi 0, %s90
      %s91 = sphi 0, %s88
      %s92 = sphi 0, %s91
      %s108 = sphi 0, %s92
      %s116 = sphi 0, %s118
      %s119 = sphi 0, %s116
      %s120 = sphi 0, %s119
      %s136 = sphi 0, %s120
    $region4: #{tpu_custom_call.1} parent=1 // loop_header_branch
      %15 = sbr.rel (%p13) target = $region8
    $region5: #{tpu_custom_call.1} parent=1 // loop_body
      %s17 = ssub.s32 %s12, 1
      %s18 = ssub.s32 %s12, 2
      %s25 = sadd.s32 1, %s20
      %p26 = scmp.ge.s32.totalorder %s25, 1
      %s27 = scalar_select %p26, 0, %s25
      %s28 = sadd.s32 1, %s19
      %s29 = scalar_select %p26, %s28, %s19
      %p30 = scmp.ge.s32.totalorder %s29, 2
      %s31 = scalar_select %p30, 0, %s29
      %s32 = ssub.s32 %s19, %s31
      %s33 = ssub.s32 %s20, %s27
      %s34 = sor.u32 %s32, %s33
      %p35 = scmp.eq.s32.totalorder %s34, 0
      %s37 = sadd.s32 %s36, 1
      %s38 = scalar_select %p35, %s36, %s37
      %p41 = pneg %p35
      %p42 = scmp.eq.s32.totalorder %s12, 1
      %p43 = por %p41, %p42
      %p44 = scmp.ne.s32.totalorder %s36, %s39
      %p45 = scmp.eq.s32.totalorder %s12, 0
      %p46 = por %p44, %p45
      %p47 = scmp.ne.s32.totalorder %s36, %s39
      %p48 = scmp.eq.s32.totalorder %s17, 1
      %p49 = por %p47, %p48
      %p50 = scmp.ne.s32.totalorder %s39, %s40
      %p51 = scmp.eq.s32.totalorder %s17, 0
      %p52 = por %p50, %p51
      %p53 = scmp.ne.s32.totalorder %s39, %s40
      %p54 = scmp.eq.s32.totalorder %s18, 1
      %p55 = por %p53, %p54
      %p57 = scmp.ne.s32.totalorder %s40, %s56
      %p58 = scmp.eq.s32.totalorder %s18, 0
      %p59 = por %p57, %p58
      %s60 = ssub.s32 %s19, %s31
      %p61 = scmp.eq.s32.totalorder %s60, 0
      %s63 = sadd.s32 %s62, 1
      %s64 = scalar_select %p61, %s62, %s63
      %p67 = pneg %p61
      %p68 = scmp.eq.s32.totalorder %s12, 1
      %p69 = por %p67, %p68
      %p70 = scmp.ne.s32.totalorder %s62, %s65
      %p71 = scmp.eq.s32.totalorder %s12, 0
      %p72 = por %p70, %p71
      %p73 = scmp.ne.s32.totalorder %s62, %s65
      %p74 = scmp.eq.s32.totalorder %s17, 1
      %p75 = por %p73, %p74
      %p76 = scmp.ne.s32.totalorder %s65, %s66
      %p77 = scmp.eq.s32.totalorder %s17, 0
      %p78 = por %p76, %p77
      %p79 = scmp.ne.s32.totalorder %s65, %s66
      %p80 = scmp.eq.s32.totalorder %s18, 1
      %p81 = por %p79, %p80
      %p83 = scmp.ne.s32.totalorder %s66, %s82
      %p84 = scmp.eq.s32.totalorder %s18, 0
      %p85 = por %p83, %p84
      %s86 = ssub.s32 %s19, %s31
      %p87 = scmp.eq.s32.totalorder %s86, 0
      %s89 = sadd.s32 %s88, 1
      %s90 = scalar_select %p87, %s88, %s89
      %p93 = pneg %p87
      %p94 = scmp.eq.s32.totalorder %s12, 1
      %p95 = por %p93, %p94
      %p96 = scmp.ne.s32.totalorder %s88, %s91
      %p97 = scmp.eq.s32.totalorder %s12, 0
      %p98 = por %p96, %p97
      %p99 = scmp.ne.s32.totalorder %s88, %s91
      %p100 = scmp.eq.s32.totalorder %s17, 1
      %p101 = por %p99, %p100
      %p102 = scmp.ne.s32.totalorder %s91, %s92
      %p103 = scmp.eq.s32.totalorder %s17, 0
      %p104 = por %p102, %p103
      %p105 = scmp.ne.s32.totalorder %s91, %s92
      %p106 = scmp.eq.s32.totalorder %s18, 1
      %p107 = por %p105, %p106
      %p109 = scmp.ne.s32.totalorder %s92, %s108
      %p110 = scmp.eq.s32.totalorder %s18, 0
      %p111 = por %p109, %p110
      %s112 = ssub.s32 %s19, %s31
      %s113 = ssub.s32 %s20, %s27
      %s114 = sor.u32 %s112, %s113
      %p115 = scmp.eq.s32.totalorder %s114, 0
      %s117 = sadd.s32 %s116, 1
      %s118 = scalar_select %p115, %s116, %s117
      %p121 = pneg %p115
      %p122 = scmp.eq.s32.totalorder %s12, 1
      %p123 = por %p121, %p122
      %p124 = scmp.ne.s32.totalorder %s116, %s119
      %p125 = scmp.eq.s32.totalorder %s12, 0
      %p126 = por %p124, %p125
      %p127 = scmp.ne.s32.totalorder %s116, %s119
      %p128 = scmp.eq.s32.totalorder %s17, 1
      %p129 = por %p127, %p128
      %p130 = scmp.ne.s32.totalorder %s119, %s120
      %p131 = scmp.eq.s32.totalorder %s17, 0
      %p132 = por %p130, %p131
      %p133 = scmp.ne.s32.totalorder %s119, %s120
      %p134 = scmp.eq.s32.totalorder %s18, 1
      %p135 = por %p133, %p134
      %p137 = scmp.ne.s32.totalorder %s120, %s136
      %p138 = scmp.eq.s32.totalorder %s18, 0
      %p139 = por %p137, %p138
      %p140 = scmp.le.s32.totalorder 1, %s12
      %p141 = scmp.lt.s32.totalorder %s12, 3
      %p142 = pnand %p140, %p141
      %p143 = pneg %p142
      // Predicated region
      $region9: #{tpu_custom_call.1} parent=5 // pred_check
        _
      $region10: #{tpu_custom_call.1} parent=5 // pred_check_branch
        %145 = sbr.rel (%p142) target = $region12
      $region11: #{tpu_custom_call.1} parent=5 // pred_region
        %s146 = ssub.s32 %s12, 1
      $region12: #{tpu_custom_call.1} parent=5 // pred_fallthru
        _
      %p147 = scmp.lt.s32.totalorder %s12, 2
      // Predicated region
      $region13: #{tpu_custom_call.1} parent=5 // pred_check
        %p148 = pneg %p147
      $region14: #{tpu_custom_call.1} parent=5 // pred_check_branch
        %150 = sbr.rel (%p148) target = $region16
      $region15: #{tpu_custom_call.1} parent=5 // pred_region
        // Predicated region
        $region17: #{tpu_custom_call.1} parent=15 // pred_check
          %p151 = pneg %p46
        $region18: #{tpu_custom_call.1} parent=15 // pred_check_branch
          %153 = sbr.rel (%p151) target = $region20
        $region19: #{tpu_custom_call.1} parent=15 // pred_region
          %s154 = smul.u32 2, %s19
          %s155 = smul.u32 16, %s20
          %p156 = scmp.lt.s32.totalorder %s154, 3
          %s157 = scalar_select %p156, %s154, 3
          %p158 = scmp.lt.s32.totalorder %s155, 15
          %s159 = scalar_select %p158, %s155, 15
          %s160 = smul.addr %s157, 16
          %s161 = sadd.s32 %s159, %s160
          %s162 = smul.addr %s161, 8
          %s163 = scalar_lea.vmem %s0, %s162
          %s164 = smul.u32 2, %s19
          %s165 = smul.u32 16, %s20
        $region20: #{tpu_custom_call.1} parent=15 // pred_fallthru
          _
        // Predicated region
        $region21: #{tpu_custom_call.1} parent=15 // pred_check
          %p166 = pneg %p72
        $region22: #{tpu_custom_call.1} parent=15 // pred_check_branch
          %168 = sbr.rel (%p166) target = $region24
        $region23: #{tpu_custom_call.1} parent=15 // pred_region
          %s169 = smul.u32 2, %s19
          %p170 = scmp.lt.s32.totalorder %s169, 3
          %s171 = scalar_select %p170, %s169, 3
          %s172 = smul.addr %s171, 8
          %s173 = scalar_lea.vmem %s1, %s172
          %s174 = smul.u32 2, %s19
        $region24: #{tpu_custom_call.1} parent=15 // pred_fallthru
          _
        // Predicated region
        $region25: #{tpu_custom_call.1} parent=15 // pred_check
          %p175 = pneg %p98
        $region26: #{tpu_custom_call.1} parent=15 // pred_check_branch
          %177 = sbr.rel (%p175) target = $region28
        $region27: #{tpu_custom_call.1} parent=15 // pred_region
          %s178 = smul.u32 2, %s19
          %p179 = scmp.lt.s32.totalorder %s178, 3
          %s180 = scalar_select %p179, %s178, 3
          %s181 = smul.addr %s180, 8
          %s182 = scalar_lea.vmem %s2, %s181
          %s183 = smul.u32 2, %s19
        $region28: #{tpu_custom_call.1} parent=15 // pred_fallthru
          _
      $region16: #{tpu_custom_call.1} parent=5 // pred_fallthru
        _
      %p184 = scmp.le.s32.totalorder 1, %s12
      %p185 = scmp.lt.s32.totalorder %s12, 3
      %p186 = pnand %p184, %p185
      %p187 = pneg %p186
      // Predicated region
      $region29: #{tpu_custom_call.1} parent=5 // pred_check
        _
      $region30: #{tpu_custom_call.1} parent=5 // pred_check_branch
        %189 = sbr.rel (%p186) target = $region32
      $region31: #{tpu_custom_call.1} parent=5 // pred_region
        %s190 = ssub.s32 %s12, 1
        %s191 = smul.u32 2, %s21
        %s192 = smul.u32 16, %s22
        %p193 = scmp.lt.s32.totalorder %s191, 3
        %s194 = scalar_select %p193, %s191, 3
        %p195 = scmp.lt.s32.totalorder %s192, 15
        %s196 = scalar_select %p195, %s192, 15
        %s197 = smul.addr %s194, 16
        %s198 = sadd.s32 %s196, %s197
        %s199 = smul.addr %s198, 8
        %s200 = scalar_lea.vmem %s0, %s199
        %p201 = pneg %p52
        %p202 = pneg %p49
        %s203 = smul.u32 2, %s21
        %p204 = scmp.lt.s32.totalorder %s203, 3
        %s205 = scalar_select %p204, %s203, 3
        %s206 = smul.addr %s205, 8
        %s207 = scalar_lea.vmem %s1, %s206
        %p208 = pneg %p78
        %p209 = pneg %p75
        %s210 = smul.u32 2, %s21
        %p211 = scmp.lt.s32.totalorder %s210, 3
        %s212 = scalar_select %p211, %s210, 3
        %s213 = smul.addr %s212, 8
        %s214 = scalar_lea.vmem %s2, %s213
        %p215 = pneg %p104
        %p216 = pneg %p101
        %p217 = pneg %p132
        %p218 = pneg %p129
        %s219 = sand.u32 %s119, 1
        %s220 = scalar_lea.sflag [#allocation3], %s219
        %s221 = sand.u32 %s119, 1
        %s222 = smul.addr %s221, 16
        %s223 = scalar_lea.vmem [#allocation2], %s222
        %s224 = smul.u32 2, %s21
        %s225 = smul.u32 16, %s22
        %p226 = scmp.lt.s32.totalorder %s224, 3
        %s227 = scalar_select %p226, %s224, 3
        %p228 = scmp.lt.s32.totalorder %s225, 15
        %s229 = scalar_select %p228, %s225, 15
        %s230 = smul.addr %s227, 16
        %s231 = sadd.s32 %s229, %s230
        %s232 = smul.addr %s231, 8
        %s233 = scalar_lea.vmem %s0, %s232
        %s234 = smul.u32 2, %s21
        %s235 = smul.u32 16, %s22
        %s236 = smul.u32 2, %s21
        %p237 = scmp.lt.s32.totalorder %s236, 3
        %s238 = scalar_select %p237, %s236, 3
        %s239 = smul.addr %s238, 8
        %s240 = scalar_lea.vmem %s1, %s239
        %s241 = smul.u32 2, %s21
        %s242 = smul.u32 2, %s21
        %p243 = scmp.lt.s32.totalorder %s242, 3
        %s244 = scalar_select %p243, %s242, 3
        %s245 = smul.addr %s244, 8
        %s246 = scalar_lea.vmem %s2, %s245
        %s247 = smul.u32 2, %s21
        %s248 = smul.u32 2, %s21
        %v249 = vld [vmem:[%s233] sm:$0xff]
        %v250 = vld [vmem:[%s233 + $0x8] sm:$0xff]
        %v251 = vld [vmem:[%s233 + $0x10] sm:$0xff]
        %v252 = vld [vmem:[%s233 + $0x18] sm:$0xff]
        %v253 = vld [vmem:[%s233 + $0x20] sm:$0xff]
        %v254 = vld [vmem:[%s233 + $0x28] sm:$0xff]
        %v255 = vld [vmem:[%s233 + $0x30] sm:$0xff]
        %v256 = vld [vmem:[%s233 + $0x38] sm:$0xff]
        %v257 = vld [vmem:[%s233 + $0x40] sm:$0xff]
        %v258 = vld [vmem:[%s233 + $0x48] sm:$0xff]
        %v259 = vld [vmem:[%s233 + $0x50] sm:$0xff]
        %v260 = vld [vmem:[%s233 + $0x58] sm:$0xff]
        %v261 = vld [vmem:[%s233 + $0x60] sm:$0xff]
        %v262 = vld [vmem:[%s233 + $0x68] sm:$0xff]
        %v263 = vld [vmem:[%s233 + $0x70] sm:$0xff]
        %v264 = vld [vmem:[%s233 + $0x78] sm:$0xff]
        %v265 = vld [vmem:[%s233 + $0x80] sm:$0xff]
        %v266 = vld [vmem:[%s233 + $0x88] sm:$0xff]
        %v267 = vld [vmem:[%s233 + $0x90] sm:$0xff]
        %v268 = vld [vmem:[%s233 + $0x98] sm:$0xff]
        %v269 = vld [vmem:[%s233 + $0xa0] sm:$0xff]
        %v270 = vld [vmem:[%s233 + $0xa8] sm:$0xff]
        %v271 = vld [vmem:[%s233 + $0xb0] sm:$0xff]
        %v272 = vld [vmem:[%s233 + $0xb8] sm:$0xff]
        %v273 = vld [vmem:[%s233 + $0xc0] sm:$0xff]
        %v274 = vld [vmem:[%s233 + $0xc8] sm:$0xff]
        %v275 = vld [vmem:[%s233 + $0xd0] sm:$0xff]
        %v276 = vld [vmem:[%s233 + $0xd8] sm:$0xff]
        %v277 = vld [vmem:[%s233 + $0xe0] sm:$0xff]
        %v278 = vld [vmem:[%s233 + $0xe8] sm:$0xff]
        %v279 = vld [vmem:[%s233 + $0xf0] sm:$0xff]
        %v280 = vld [vmem:[%s233 + $0xf8] sm:$0xff]
        %v281 = vmul.f32 %v249, 0.35355338
        %v282 = vmul.f32 %v250, 0.35355338
        %v283 = vmul.f32 %v251, 0.35355338
        %v284 = vmul.f32 %v252, 0.35355338
        %v285 = vmul.f32 %v253, 0.35355338
        %v286 = vmul.f32 %v254, 0.35355338
        %v287 = vmul.f32 %v255, 0.35355338
        %v288 = vmul.f32 %v256, 0.35355338
        %v289 = vmul.f32 %v257, 0.35355338
        %v290 = vmul.f32 %v258, 0.35355338
        %v291 = vmul.f32 %v259, 0.35355338
        %v292 = vmul.f32 %v260, 0.35355338
        %v293 = vmul.f32 %v261, 0.35355338
        %v294 = vmul.f32 %v262, 0.35355338
        %v295 = vmul.f32 %v263, 0.35355338
        %v296 = vmul.f32 %v264, 0.35355338
        %v297 = vmul.f32 %v265, 0.35355338
        %v298 = vmul.f32 %v266, 0.35355338
        %v299 = vmul.f32 %v267, 0.35355338
        %v300 = vmul.f32 %v268, 0.35355338
        %v301 = vmul.f32 %v269, 0.35355338
        %v302 = vmul.f32 %v270, 0.35355338
        %v303 = vmul.f32 %v271, 0.35355338
        %v304 = vmul.f32 %v272, 0.35355338
        %v305 = vmul.f32 %v273, 0.35355338
        %v306 = vmul.f32 %v274, 0.35355338
        %v307 = vmul.f32 %v275, 0.35355338
        %v308 = vmul.f32 %v276, 0.35355338
        %v309 = vmul.f32 %v277, 0.35355338
        %v310 = vmul.f32 %v278, 0.35355338
        %v311 = vmul.f32 %v279, 0.35355338
        %v312 = vmul.f32 %v280, 0.35355338
        %v313 = vld [vmem:[%s240] sm:$0xff]
        %v314 = vld [vmem:[%s240 + $0x8] sm:$0xff]
        %vm315 = vcmask 64512
        %v317 = vsel %vm315, %v281, 0
        %v320 = vsel %vm315, %v282, 0
        %v323 = vsel %vm315, %v283, 0
        %v326 = vsel %vm315, %v284, 0
        %v329 = vsel %vm315, %v285, 0
        %v332 = vsel %vm315, %v286, 0
        %v335 = vsel %vm315, %v287, 0
        %v338 = vsel %vm315, %v288, 0
        %v341 = vsel %vm315, %v289, 0
        %v344 = vsel %vm315, %v290, 0
        %v347 = vsel %vm315, %v291, 0
        %v350 = vsel %vm315, %v292, 0
        %v353 = vsel %vm315, %v293, 0
        %v356 = vsel %vm315, %v294, 0
        %v359 = vsel %vm315, %v295, 0
        %v362 = vsel %vm315, %v296, 0
        %364 = vmatprep.subr.mxu0 0.0
        %365 = vmatpush1.msra.mxu0 %v313
        %366 = vmatprep.subr.mxu0 0.0
        %367 = vmatpush1.msra.mxu0 0.0
        %368 = vmatprep.subr.mxu0 0.0
        %369 = vmatpush1.msra.mxu0 0.0
        %370 = vmatprep.subr.mxu0 0.0
        %371 = vmatpush1.msra.mxu0 0.0
        %372 = vmatprep.subr.mxu0 0.0
        %373 = vmatpush1.msra.mxu0 0.0
        %374 = vmatprep.subr.mxu0 0.0
        %375 = vmatpush1.msra.mxu0 0.0
        %376 = vmatprep.subr.mxu0 0.0
        %377 = vmatpush1.msra.mxu0 0.0
        %378 = vmatprep.subr.mxu0 0.0
        %379 = vmatpush1.msra.mxu0 0.0
        %380 = vmatprep.subr.mxu0 0.0
        %381 = vmatpush1.msra.mxu0 0.0
        %382 = vmatprep.subr.mxu0 0.0
        %383 = vmatpush1.msra.mxu0 0.0
        %384 = vmatprep.subr.mxu0 0.0
        %385 = vmatpush1.msra.mxu0 0.0
        %386 = vmatprep.subr.mxu0 0.0
        %387 = vmatpush1.msra.mxu0 0.0
        %388 = vmatprep.subr.mxu0 0.0
        %389 = vmatpush1.msra.mxu0 0.0
        %390 = vmatprep.subr.mxu0 0.0
        %391 = vmatpush1.msra.mxu0 0.0
        %392 = vmatprep.subr.mxu0 0.0
        %393 = vmatpush1.msra.mxu0 0.0
        %394 = vmatprep.subr.mxu0 0.0
        %395 = vmatpush1.msra.mxu0 0.0
        %396 = vmatprep.subr.mxu0 0.0
        %397 = vmatpush1.msra.mxu0 0.0
        %398 = vmatprep.subr.mxu0 0.0
        %399 = vmatpush1.msra.mxu0 0.0
        %400 = vmatprep.subr.mxu0 0.0
        %401 = vmatpush1.msra.mxu0 0.0
        %402 = vmatprep.subr.mxu0 0.0
        %403 = vmatpush1.msra.mxu0 0.0
        %404 = vmatprep.subr.mxu0 0.0
        %405 = vmatpush1.msra.mxu0 0.0
        %406 = vmatprep.subr.mxu0 0.0
        %407 = vmatpush1.msra.mxu0 0.0
        %408 = vmatprep.subr.mxu0 0.0
        %409 = vmatpush1.msra.mxu0 0.0
        %410 = vmatprep.subr.mxu0 0.0
        %411 = vmatpush1.msra.mxu0 0.0
        %412 = vmatprep.subr.mxu0 0.0
        %413 = vmatpush1.msra.mxu0 0.0
        %414 = vmatprep.subr.mxu0 0.0
        %415 = vmatpush1.msra.mxu0 0.0
        %416 = vmatprep.subr.mxu0 0.0
        %417 = vmatpush1.msra.mxu0 0.0
        %418 = vmatprep.subr.mxu0 0.0
        %419 = vmatpush1.msra.mxu0 0.0
        %420 = vmatprep.subr.mxu0 0.0
        %421 = vmatpush1.msra.mxu0 0.0
        %422 = vmatprep.subr.mxu0 0.0
        %423 = vmatpush1.msra.mxu0 0.0
        %424 = vmatprep.subr.mxu0 0.0
        %425 = vmatpush1.msra.mxu0 0.0
        %426 = vmatprep.subr.mxu0 0.0
        %427 = vmatpush1.msra.mxu0 0.0
        %428 = vmatprep.mubr.f32.mxu0 0.0
        %429 = vmatmul.mubr.f32.gmra.mrb[0].mxu0 %v317
        %v430 = vpop.f32.mrb[0].mxu0
        %v431 = vadd.f32 0.0, %v430
        %v432 = vpop.f32.mrb[0].mxu0
        %433 = vmatprep.mubr.f32.mxu0 0.0
        %434 = vmatmul.mubr.f32.gmra.mrb[0].mxu0 %v320
        %v435 = vpop.f32.mrb[0].mxu0
        %v436 = vadd.f32 0.0, %v435
        %v437 = vpop.f32.mrb[0].mxu0
        %438 = vmatprep.mubr.f32.mxu0 0.0
        %439 = vmatmul.mubr.f32.gmra.mrb[0].mxu0 %v323
        %v440 = vpop.f32.mrb[0].mxu0
        %v441 = vadd.f32 0.0, %v440
        %v442 = vpop.f32.mrb[0].mxu0
        %443 = vmatprep.mubr.f32.mxu0 0.0
        %444 = vmatmul.mubr.f32.gmra.mrb[0].mxu0 %v326
        %v445 = vpop.f32.mrb[0].mxu0
        %v446 = vadd.f32 0.0, %v445
        %v447 = vpop.f32.mrb[0].mxu0
        %448 = vmatprep.mubr.f32.mxu0 0.0
        %449 = vmatmul.mubr.f32.gmra.mrb[0].mxu0 %v329
        %v450 = vpop.f32.mrb[0].mxu0
        %v451 = vadd.f32 0.0, %v450
        %v452 = vpop.f32.mrb[0].mxu0
        %453 = vmatprep.mubr.f32.mxu0 0.0
        %454 = vmatmul.mubr.f32.gmra.mrb[0].mxu0 %v332
        %v455 = vpop.f32.mrb[0].mxu0
        %v456 = vadd.f32 0.0, %v455
        %v457 = vpop.f32.mrb[0].mxu0
        %458 = vmatprep.mubr.f32.mxu0 0.0
        %459 = vmatmul.mubr.f32.gmra.mrb[0].mxu0 %v335
        %v460 = vpop.f32.mrb[0].mxu0
        %v461 = vadd.f32 0.0, %v460
        %v462 = vpop.f32.mrb[0].mxu0
        %463 = vmatprep.mubr.f32.mxu0 0.0
        %464 = vmatmul.mubr.f32.gmra.mrb[0].mxu0 %v338
        %v465 = vpop.f32.mrb[0].mxu0
        %v466 = vadd.f32 0.0, %v465
        %v467 = vpop.f32.mrb[0].mxu0
        %468 = vmatprep.mubr.f32.mxu0 0.0
        %469 = vmatmul.mubr.f32.gmra.mrb[0].mxu0 %v341
        %v470 = vpop.f32.mrb[0].mxu0
        %v471 = vadd.f32 0.0, %v470
        %v472 = vpop.f32.mrb[0].mxu0
        %473 = vmatprep.mubr.f32.mxu0 0.0
        %474 = vmatmul.mubr.f32.gmra.mrb[0].mxu0 %v344
        %v475 = vpop.f32.mrb[0].mxu0
        %v476 = vadd.f32 0.0, %v475
        %v477 = vpop.f32.mrb[0].mxu0
        %478 = vmatprep.mubr.f32.mxu0 0.0
        %479 = vmatmul.mubr.f32.gmra.mrb[0].mxu0 %v347
        %v480 = vpop.f32.mrb[0].mxu0
        %v481 = vadd.f32 0.0, %v480
        %v482 = vpop.f32.mrb[0].mxu0
        %483 = vmatprep.mubr.f32.mxu0 0.0
        %484 = vmatmul.mubr.f32.gmra.mrb[0].mxu0 %v350
        %v485 = vpop.f32.mrb[0].mxu0
        %v486 = vadd.f32 0.0, %v485
        %v487 = vpop.f32.mrb[0].mxu0
        %488 = vmatprep.mubr.f32.mxu0 0.0
        %489 = vmatmul.mubr.f32.gmra.mrb[0].mxu0 %v353
        %v490 = vpop.f32.mrb[0].mxu0
        %v491 = vadd.f32 0.0, %v490
        %v492 = vpop.f32.mrb[0].mxu0
        %493 = vmatprep.mubr.f32.mxu0 0.0
        %494 = vmatmul.mubr.f32.gmra.mrb[0].mxu0 %v356
        %v495 = vpop.f32.mrb[0].mxu0
        %v496 = vadd.f32 0.0, %v495
        %v497 = vpop.f32.mrb[0].mxu0
        %498 = vmatprep.mubr.f32.mxu0 0.0
        %499 = vmatmul.mubr.f32.gmra.mrb[0].mxu0 %v359
        %v500 = vpop.f32.mrb[0].mxu0
        %v501 = vadd.f32 0.0, %v500
        %v502 = vpop.f32.mrb[0].mxu0
        %503 = vmatprep.mubr.f32.mxu0 0.0
        %504 = vmatmul.mubr.f32.gmra.mrb[0].mxu0 %v362
        %v505 = vpop.f32.mrb[0].mxu0
        %v506 = vadd.f32 0.0, %v505
        %v507 = vpop.f32.mrb[0].mxu0
        %508 = vdwg.mxu0
        %v510 = vsel %vm315, %v297, 0
        %v513 = vsel %vm315, %v298, 0
        %v516 = vsel %vm315, %v299, 0
        %v519 = vsel %vm315, %v300, 0
        %v522 = vsel %vm315, %v301, 0
        %v525 = vsel %vm315, %v302, 0
        %v528 = vsel %vm315, %v303, 0
        %v531 = vsel %vm315, %v304, 0
        %v534 = vsel %vm315, %v305, 0
        %v537 = vsel %vm315, %v306, 0
        %v540 = vsel %vm315, %v307, 0
        %v543 = vsel %vm315, %v308, 0
        %v546 = vsel %vm315, %v309, 0
        %v549 = vsel %vm315, %v310, 0
        %v552 = vsel %vm315, %v311, 0
        %v555 = vsel %vm315, %v312, 0
        %557 = vmatprep.subr.mxu0 0.0
        %558 = vmatpush1.msra.mxu0 %v314
        %559 = vmatprep.subr.mxu0 0.0
        %560 = vmatpush1.msra.mxu0 0.0
        %561 = vmatprep.subr.mxu0 0.0
        %562 = vmatpush1.msra.mxu0 0.0
        %563 = vmatprep.subr.mxu0 0.0
        %564 = vmatpush1.msra.mxu0 0.0
        %565 = vmatprep.subr.mxu0 0.0
        %566 = vmatpush1.msra.mxu0 0.0
        %567 = vmatprep.subr.mxu0 0.0
        %568 = vmatpush1.msra.mxu0 0.0
        %569 = vmatprep.subr.mxu0 0.0
        %570 = vmatpush1.msra.mxu0 0.0
        %571 = vmatprep.subr.mxu0 0.0
        %572 = vmatpush1.msra.mxu0 0.0
        %573 = vmatprep.subr.mxu0 0.0
        %574 = vmatpush1.msra.mxu0 0.0
        %575 = vmatprep.subr.mxu0 0.0
        %576 = vmatpush1.msra.mxu0 0.0
        %577 = vmatprep.subr.mxu0 0.0
        %578 = vmatpush1.msra.mxu0 0.0
        %579 = vmatprep.subr.mxu0 0.0
        %580 = vmatpush1.msra.mxu0 0.0
        %581 = vmatprep.subr.mxu0 0.0
        %582 = vmatpush1.msra.mxu0 0.0
        %583 = vmatprep.subr.mxu0 0.0
        %584 = vmatpush1.msra.mxu0 0.0
        %585 = vmatprep.subr.mxu0 0.0
        %586 = vmatpush1.msra.mxu0 0.0
        %587 = vmatprep.subr.mxu0 0.0
        %588 = vmatpush1.msra.mxu0 0.0
        %589 = vmatprep.subr.mxu0 0.0
        %590 = vmatpush1.msra.mxu0 0.0
        %591 = vmatprep.subr.mxu0 0.0
        %592 = vmatpush1.msra.mxu0 0.0
        %593 = vmatprep.subr.mxu0 0.0
        %594 = vmatpush1.msra.mxu0 0.0
        %595 = vmatprep.subr.mxu0 0.0
        %596 = vmatpush1.msra.mxu0 0.0
        %597 = vmatprep.subr.mxu0 0.0
        %598 = vmatpush1.msra.mxu0 0.0
        %599 = vmatprep.subr.mxu0 0.0
        %600 = vmatpush1.msra.mxu0 0.0
        %601 = vmatprep.subr.mxu0 0.0
        %602 = vmatpush1.msra.mxu0 0.0
        %603 = vmatprep.subr.mxu0 0.0
        %604 = vmatpush1.msra.mxu0 0.0
        %605 = vmatprep.subr.mxu0 0.0
        %606 = vmatpush1.msra.mxu0 0.0
        %607 = vmatprep.subr.mxu0 0.0
        %608 = vmatpush1.msra.mxu0 0.0
        %609 = vmatprep.subr.mxu0 0.0
        %610 = vmatpush1.msra.mxu0 0.0
        %611 = vmatprep.subr.mxu0 0.0
        %612 = vmatpush1.msra.mxu0 0.0
        %613 = vmatprep.subr.mxu0 0.0
        %614 = vmatpush1.msra.mxu0 0.0
        %615 = vmatprep.subr.mxu0 0.0
        %616 = vmatpush1.msra.mxu0 0.0
        %617 = vmatprep.subr.mxu0 0.0
        %618 = vmatpush1.msra.mxu0 0.0
        %619 = vmatprep.subr.mxu0 0.0
        %620 = vmatpush1.msra.mxu0 0.0
        %621 = vmatprep.mubr.f32.mxu0 0.0
        %622 = vmatmul.mubr.f32.gmra.mrb[0].mxu0 %v510
        %v623 = vpop.f32.mrb[0].mxu0
        %v624 = vadd.f32 0.0, %v623
        %v625 = vpop.f32.mrb[0].mxu0
        %626 = vmatprep.mubr.f32.mxu0 0.0
        %627 = vmatmul.mubr.f32.gmra.mrb[0].mxu0 %v513
        %v628 = vpop.f32.mrb[0].mxu0
        %v629 = vadd.f32 0.0, %v628
        %v630 = vpop.f32.mrb[0].mxu0
        %631 = vmatprep.mubr.f32.mxu0 0.0
        %632 = vmatmul.mubr.f32.gmra.mrb[0].mxu0 %v516
        %v633 = vpop.f32.mrb[0].mxu0
        %v634 = vadd.f32 0.0, %v633
        %v635 = vpop.f32.mrb[0].mxu0
        %636 = vmatprep.mubr.f32.mxu0 0.0
        %637 = vmatmul.mubr.f32.gmra.mrb[0].mxu0 %v519
        %v638 = vpop.f32.mrb[0].mxu0
        %v639 = vadd.f32 0.0, %v638
        %v640 = vpop.f32.mrb[0].mxu0
        %641 = vmatprep.mubr.f32.mxu0 0.0
        %642 = vmatmul.mubr.f32.gmra.mrb[0].mxu0 %v522
        %v643 = vpop.f32.mrb[0].mxu0
        %v644 = vadd.f32 0.0, %v643
        %v645 = vpop.f32.mrb[0].mxu0
        %646 = vmatprep.mubr.f32.mxu0 0.0
        %647 = vmatmul.mubr.f32.gmra.mrb[0].mxu0 %v525
        %v648 = vpop.f32.mrb[0].mxu0
        %v649 = vadd.f32 0.0, %v648
        %v650 = vpop.f32.mrb[0].mxu0
        %651 = vmatprep.mubr.f32.mxu0 0.0
        %652 = vmatmul.mubr.f32.gmra.mrb[0].mxu0 %v528
        %v653 = vpop.f32.mrb[0].mxu0
        %v654 = vadd.f32 0.0, %v653
        %v655 = vpop.f32.mrb[0].mxu0
        %656 = vmatprep.mubr.f32.mxu0 0.0
        %657 = vmatmul.mubr.f32.gmra.mrb[0].mxu0 %v531
        %v658 = vpop.f32.mrb[0].mxu0
        %v659 = vadd.f32 0.0, %v658
        %v660 = vpop.f32.mrb[0].mxu0
        %661 = vmatprep.mubr.f32.mxu0 0.0
        %662 = vmatmul.mubr.f32.gmra.mrb[0].mxu0 %v534
        %v663 = vpop.f32.mrb[0].mxu0
        %v664 = vadd.f32 0.0, %v663
        %v665 = vpop.f32.mrb[0].mxu0
        %666 = vmatprep.mubr.f32.mxu0 0.0
        %667 = vmatmul.mubr.f32.gmra.mrb[0].mxu0 %v537
        %v668 = vpop.f32.mrb[0].mxu0
        %v669 = vadd.f32 0.0, %v668
        %v670 = vpop.f32.mrb[0].mxu0
        %671 = vmatprep.mubr.f32.mxu0 0.0
        %672 = vmatmul.mubr.f32.gmra.mrb[0].mxu0 %v540
        %v673 = vpop.f32.mrb[0].mxu0
        %v674 = vadd.f32 0.0, %v673
        %v675 = vpop.f32.mrb[0].mxu0
        %676 = vmatprep.mubr.f32.mxu0 0.0
        %677 = vmatmul.mubr.f32.gmra.mrb[0].mxu0 %v543
        %v678 = vpop.f32.mrb[0].mxu0
        %v679 = vadd.f32 0.0, %v678
        %v680 = vpop.f32.mrb[0].mxu0
        %681 = vmatprep.mubr.f32.mxu0 0.0
        %682 = vmatmul.mubr.f32.gmra.mrb[0].mxu0 %v546
        %v683 = vpop.f32.mrb[0].mxu0
        %v684 = vadd.f32 0.0, %v683
        %v685 = vpop.f32.mrb[0].mxu0
        %686 = vmatprep.mubr.f32.mxu0 0.0
        %687 = vmatmul.mubr.f32.gmra.mrb[0].mxu0 %v549
        %v688 = vpop.f32.mrb[0].mxu0
        %v689 = vadd.f32 0.0, %v688
        %v690 = vpop.f32.mrb[0].mxu0
        %691 = vmatprep.mubr.f32.mxu0 0.0
        %692 = vmatmul.mubr.f32.gmra.mrb[0].mxu0 %v552
        %v693 = vpop.f32.mrb[0].mxu0
        %v694 = vadd.f32 0.0, %v693
        %v695 = vpop.f32.mrb[0].mxu0
        %696 = vmatprep.mubr.f32.mxu0 0.0
        %697 = vmatmul.mubr.f32.gmra.mrb[0].mxu0 %v555
        %v698 = vpop.f32.mrb[0].mxu0
        %v699 = vadd.f32 0.0, %v698
        %v700 = vpop.f32.mrb[0].mxu0
        %701 = vdwg.mxu0
        %v702 = vlaneseq
        %v703 = vand.u32 %v702, 127
        %vm704 = vcmp.lt.s32.totalorder %v703, 16
        %v705 = vsel %vm704, %v431, -1e+30
        %v706 = vsel %vm704, %v436, -1e+30
        %v707 = vsel %vm704, %v441, -1e+30
        %v708 = vsel %vm704, %v446, -1e+30
        %v709 = vsel %vm704, %v451, -1e+30
        %v710 = vsel %vm704, %v456, -1e+30
        %v711 = vsel %vm704, %v461, -1e+30
        %v712 = vsel %vm704, %v466, -1e+30
        %v713 = vsel %vm704, %v471, -1e+30
        %v714 = vsel %vm704, %v476, -1e+30
        %v715 = vsel %vm704, %v481, -1e+30
        %v716 = vsel %vm704, %v486, -1e+30
        %v717 = vsel %vm704, %v491, -1e+30
        %v718 = vsel %vm704, %v496, -1e+30
        %v719 = vsel %vm704, %v501, -1e+30
        %v720 = vsel %vm704, %v506, -1e+30
        %v721 = vsel %vm704, %v624, -1e+30
        %v722 = vsel %vm704, %v629, -1e+30
        %v723 = vsel %vm704, %v634, -1e+30
        %v724 = vsel %vm704, %v639, -1e+30
        %v725 = vsel %vm704, %v644, -1e+30
        %v726 = vsel %vm704, %v649, -1e+30
        %v727 = vsel %vm704, %v654, -1e+30
        %v728 = vsel %vm704, %v659, -1e+30
        %v729 = vsel %vm704, %v664, -1e+30
        %v730 = vsel %vm704, %v669, -1e+30
        %v731 = vsel %vm704, %v674, -1e+30
        %v732 = vsel %vm704, %v679, -1e+30
        %v733 = vsel %vm704, %v684, -1e+30
        %v734 = vsel %vm704, %v689, -1e+30
        %v735 = vsel %vm704, %v694, -1e+30
        %v736 = vsel %vm704, %v699, -1e+30
        %737 = vmax.xlane.f32.xlu0 %v705
        %v738 = vpop.xlane.xlu0 %737
        %739 = vmax.xlane.f32.xlu0 %v706
        %v740 = vpop.xlane.xlu0 %739
        %741 = vmax.xlane.f32.xlu0 %v707
        %v742 = vpop.xlane.xlu0 %741
        %743 = vmax.xlane.f32.xlu0 %v708
        %v744 = vpop.xlane.xlu0 %743
        %745 = vmax.xlane.f32.xlu0 %v709
        %v746 = vpop.xlane.xlu0 %745
        %747 = vmax.xlane.f32.xlu0 %v710
        %v748 = vpop.xlane.xlu0 %747
        %749 = vmax.xlane.f32.xlu0 %v711
        %v750 = vpop.xlane.xlu0 %749
        %751 = vmax.xlane.f32.xlu0 %v712
        %v752 = vpop.xlane.xlu0 %751
        %753 = vmax.xlane.f32.xlu0 %v713
        %v754 = vpop.xlane.xlu0 %753
        %755 = vmax.xlane.f32.xlu0 %v714
        %v756 = vpop.xlane.xlu0 %755
        %757 = vmax.xlane.f32.xlu0 %v715
        %v758 = vpop.xlane.xlu0 %757
        %759 = vmax.xlane.f32.xlu0 %v716
        %v760 = vpop.xlane.xlu0 %759
        %761 = vmax.xlane.f32.xlu0 %v717
        %v762 = vpop.xlane.xlu0 %761
        %763 = vmax.xlane.f32.xlu0 %v718
        %v764 = vpop.xlane.xlu0 %763
        %765 = vmax.xlane.f32.xlu0 %v719
        %v766 = vpop.xlane.xlu0 %765
        %767 = vmax.xlane.f32.xlu0 %v720
        %v768 = vpop.xlane.xlu0 %767
        %769 = vmax.xlane.f32.xlu0 %v721
        %v770 = vpop.xlane.xlu0 %769
        %771 = vmax.xlane.f32.xlu0 %v722
        %v772 = vpop.xlane.xlu0 %771
        %773 = vmax.xlane.f32.xlu0 %v723
        %v774 = vpop.xlane.xlu0 %773
        %775 = vmax.xlane.f32.xlu0 %v724
        %v776 = vpop.xlane.xlu0 %775
        %777 = vmax.xlane.f32.xlu0 %v725
        %v778 = vpop.xlane.xlu0 %777
        %779 = vmax.xlane.f32.xlu0 %v726
        %v780 = vpop.xlane.xlu0 %779
        %781 = vmax.xlane.f32.xlu0 %v727
        %v782 = vpop.xlane.xlu0 %781
        %783 = vmax.xlane.f32.xlu0 %v728
        %v784 = vpop.xlane.xlu0 %783
        %785 = vmax.xlane.f32.xlu0 %v729
        %v786 = vpop.xlane.xlu0 %785
        %787 = vmax.xlane.f32.xlu0 %v730
        %v788 = vpop.xlane.xlu0 %787
        %789 = vmax.xlane.f32.xlu0 %v731
        %v790 = vpop.xlane.xlu0 %789
        %791 = vmax.xlane.f32.xlu0 %v732
        %v792 = vpop.xlane.xlu0 %791
        %793 = vmax.xlane.f32.xlu0 %v733
        %v794 = vpop.xlane.xlu0 %793
        %795 = vmax.xlane.f32.xlu0 %v734
        %v796 = vpop.xlane.xlu0 %795
        %797 = vmax.xlane.f32.xlu0 %v735
        %v798 = vpop.xlane.xlu0 %797
        %799 = vmax.xlane.f32.xlu0 %v736
        %v800 = vpop.xlane.xlu0 %799
        %v801 = vsub.f32 %v705, %v738
        %v802 = vsub.f32 %v706, %v740
        %v803 = vsub.f32 %v707, %v742
        %v804 = vsub.f32 %v708, %v744
        %v805 = vsub.f32 %v709, %v746
        %v806 = vsub.f32 %v710, %v748
        %v807 = vsub.f32 %v711, %v750
        %v808 = vsub.f32 %v712, %v752
        %v809 = vsub.f32 %v713, %v754
        %v810 = vsub.f32 %v714, %v756
        %v811 = vsub.f32 %v715, %v758
        %v812 = vsub.f32 %v716, %v760
        %v813 = vsub.f32 %v717, %v762
        %v814 = vsub.f32 %v718, %v764
        %v815 = vsub.f32 %v719, %v766
        %v816 = vsub.f32 %v720, %v768
        %v817 = vsub.f32 %v721, %v770
        %v818 = vsub.f32 %v722, %v772
        %v819 = vsub.f32 %v723, %v774
        %v820 = vsub.f32 %v724, %v776
        %v821 = vsub.f32 %v725, %v778
        %v822 = vsub.f32 %v726, %v780
        %v823 = vsub.f32 %v727, %v782
        %v824 = vsub.f32 %v728, %v784
        %v825 = vsub.f32 %v729, %v786
        %v826 = vsub.f32 %v730, %v788
        %v827 = vsub.f32 %v731, %v790
        %v828 = vsub.f32 %v732, %v792
        %v829 = vsub.f32 %v733, %v794
        %v830 = vsub.f32 %v734, %v796
        %v831 = vsub.f32 %v735, %v798
        %v832 = vsub.f32 %v736, %v800
        %v833 = vmul.f32 %v801, 1.442695
        %v834 = vpow.pop %v833
        %v835 = vmul.f32 %v802, 1.442695
        %v836 = vpow.pop %v835
        %v837 = vmul.f32 %v803, 1.442695
        %v838 = vpow.pop %v837
        %v839 = vmul.f32 %v804, 1.442695
        %v840 = vpow.pop %v839
        %v841 = vmul.f32 %v805, 1.442695
        %v842 = vpow.pop %v841
        %v843 = vmul.f32 %v806, 1.442695
        %v844 = vpow.pop %v843
        %v845 = vmul.f32 %v807, 1.442695
        %v846 = vpow.pop %v845
        %v847 = vmul.f32 %v808, 1.442695
        %v848 = vpow.pop %v847
        %v849 = vmul.f32 %v809, 1.442695
        %v850 = vpow.pop %v849
        %v851 = vmul.f32 %v810, 1.442695
        %v852 = vpow.pop %v851
        %v853 = vmul.f32 %v811, 1.442695
        %v854 = vpow.pop %v853
        %v855 = vmul.f32 %v812, 1.442695
        %v856 = vpow.pop %v855
        %v857 = vmul.f32 %v813, 1.442695
        %v858 = vpow.pop %v857
        %v859 = vmul.f32 %v814, 1.442695
        %v860 = vpow.pop %v859
        %v861 = vmul.f32 %v815, 1.442695
        %v862 = vpow.pop %v861
        %v863 = vmul.f32 %v816, 1.442695
        %v864 = vpow.pop %v863
        %v865 = vmul.f32 %v817, 1.442695
        %v866 = vpow.pop %v865
        %v867 = vmul.f32 %v818, 1.442695
        %v868 = vpow.pop %v867
        %v869 = vmul.f32 %v819, 1.442695
        %v870 = vpow.pop %v869
        %v871 = vmul.f32 %v820, 1.442695
        %v872 = vpow.pop %v871
        %v873 = vmul.f32 %v821, 1.442695
        %v874 = vpow.pop %v873
        %v875 = vmul.f32 %v822, 1.442695
        %v876 = vpow.pop %v875
        %v877 = vmul.f32 %v823, 1.442695
        %v878 = vpow.pop %v877
        %v879 = vmul.f32 %v824, 1.442695
        %v880 = vpow.pop %v879
        %v881 = vmul.f32 %v825, 1.442695
        %v882 = vpow.pop %v881
        %v883 = vmul.f32 %v826, 1.442695
        %v884 = vpow.pop %v883
        %v885 = vmul.f32 %v827, 1.442695
        %v886 = vpow.pop %v885
        %v887 = vmul.f32 %v828, 1.442695
        %v888 = vpow.pop %v887
        %v889 = vmul.f32 %v829, 1.442695
        %v890 = vpow.pop %v889
        %v891 = vmul.f32 %v830, 1.442695
        %v892 = vpow.pop %v891
        %v893 = vmul.f32 %v831, 1.442695
        %v894 = vpow.pop %v893
        %v895 = vmul.f32 %v832, 1.442695
        %v896 = vpow.pop %v895
        %897 = vadd.xlane.f32.xlu0 %v834
        %v898 = vpop.xlane.xlu0 %897
        %899 = vadd.xlane.f32.xlu0 %v836
        %v900 = vpop.xlane.xlu0 %899
        %901 = vadd.xlane.f32.xlu0 %v838
        %v902 = vpop.xlane.xlu0 %901
        %903 = vadd.xlane.f32.xlu0 %v840
        %v904 = vpop.xlane.xlu0 %903
        %905 = vadd.xlane.f32.xlu0 %v842
        %v906 = vpop.xlane.xlu0 %905
        %907 = vadd.xlane.f32.xlu0 %v844
        %v908 = vpop.xlane.xlu0 %907
        %909 = vadd.xlane.f32.xlu0 %v846
        %v910 = vpop.xlane.xlu0 %909
        %911 = vadd.xlane.f32.xlu0 %v848
        %v912 = vpop.xlane.xlu0 %911
        %913 = vadd.xlane.f32.xlu0 %v850
        %v914 = vpop.xlane.xlu0 %913
        %915 = vadd.xlane.f32.xlu0 %v852
        %v916 = vpop.xlane.xlu0 %915
        %917 = vadd.xlane.f32.xlu0 %v854
        %v918 = vpop.xlane.xlu0 %917
        %919 = vadd.xlane.f32.xlu0 %v856
        %v920 = vpop.xlane.xlu0 %919
        %921 = vadd.xlane.f32.xlu0 %v858
        %v922 = vpop.xlane.xlu0 %921
        %923 = vadd.xlane.f32.xlu0 %v860
        %v924 = vpop.xlane.xlu0 %923
        %925 = vadd.xlane.f32.xlu0 %v862
        %v926 = vpop.xlane.xlu0 %925
        %927 = vadd.xlane.f32.xlu0 %v864
        %v928 = vpop.xlane.xlu0 %927
        %929 = vadd.xlane.f32.xlu0 %v866
        %v930 = vpop.xlane.xlu0 %929
        %931 = vadd.xlane.f32.xlu0 %v868
        %v932 = vpop.xlane.xlu0 %931
        %933 = vadd.xlane.f32.xlu0 %v870
        %v934 = vpop.xlane.xlu0 %933
        %935 = vadd.xlane.f32.xlu0 %v872
        %v936 = vpop.xlane.xlu0 %935
        %937 = vadd.xlane.f32.xlu0 %v874
        %v938 = vpop.xlane.xlu0 %937
        %939 = vadd.xlane.f32.xlu0 %v876
        %v940 = vpop.xlane.xlu0 %939
        %941 = vadd.xlane.f32.xlu0 %v878
        %v942 = vpop.xlane.xlu0 %941
        %943 = vadd.xlane.f32.xlu0 %v880
        %v944 = vpop.xlane.xlu0 %943
        %945 = vadd.xlane.f32.xlu0 %v882
        %v946 = vpop.xlane.xlu0 %945
        %947 = vadd.xlane.f32.xlu0 %v884
        %v948 = vpop.xlane.xlu0 %947
        %949 = vadd.xlane.f32.xlu0 %v886
        %v950 = vpop.xlane.xlu0 %949
        %951 = vadd.xlane.f32.xlu0 %v888
        %v952 = vpop.xlane.xlu0 %951
        %953 = vadd.xlane.f32.xlu0 %v890
        %v954 = vpop.xlane.xlu0 %953
        %955 = vadd.xlane.f32.xlu0 %v892
        %v956 = vpop.xlane.xlu0 %955
        %957 = vadd.xlane.f32.xlu0 %v894
        %v958 = vpop.xlane.xlu0 %957
        %959 = vadd.xlane.f32.xlu0 %v896
        %v960 = vpop.xlane.xlu0 %959
        %v961 = vld [vmem:[%s246] sm:$0xff]
        %v962 = vld [vmem:[%s246 + $0x8] sm:$0xff]
        %963 = vmatprep.subr.mxu0 0.0
        %964 = vmatpush1.xpose.msra.mxu0 %v834
        %965 = vmatprep.subr.mxu0 0.0
        %966 = vmatpush1.xpose.msra.mxu0 %v836
        %967 = vmatprep.subr.mxu0 0.0
        %968 = vmatpush1.xpose.msra.mxu0 %v838
        %969 = vmatprep.subr.mxu0 0.0
        %970 = vmatpush1.xpose.msra.mxu0 %v840
        %971 = vmatprep.subr.mxu0 0.0
        %972 = vmatpush1.xpose.msra.mxu0 %v842
        %973 = vmatprep.subr.mxu0 0.0
        %974 = vmatpush1.xpose.msra.mxu0 %v844
        %975 = vmatprep.subr.mxu0 0.0
        %976 = vmatpush1.xpose.msra.mxu0 %v846
        %977 = vmatprep.subr.mxu0 0.0
        %978 = vmatpush1.xpose.msra.mxu0 %v848
        %979 = vmatprep.subr.mxu0 0.0
        %980 = vmatpush1.xpose.msra.mxu0 %v850
        %981 = vmatprep.subr.mxu0 0.0
        %982 = vmatpush1.xpose.msra.mxu0 %v852
        %983 = vmatprep.subr.mxu0 0.0
        %984 = vmatpush1.xpose.msra.mxu0 %v854
        %985 = vmatprep.subr.mxu0 0.0
        %986 = vmatpush1.xpose.msra.mxu0 %v856
        %987 = vmatprep.subr.mxu0 0.0
        %988 = vmatpush1.xpose.msra.mxu0 %v858
        %989 = vmatprep.subr.mxu0 0.0
        %990 = vmatpush1.xpose.msra.mxu0 %v860
        %991 = vmatprep.subr.mxu0 0.0
        %992 = vmatpush1.xpose.msra.mxu0 %v862
        %993 = vmatprep.subr.mxu0 0.0
        %994 = vmatpush1.xpose.msra.mxu0 %v864
        %995 = vmatprep.subr.mxu0 0.0
        %996 = vmatpush1.xpose.msra.mxu0 0.0
        %997 = vmatprep.subr.mxu0 0.0
        %998 = vmatpush1.xpose.msra.mxu0 0.0
        %999 = vmatprep.subr.mxu0 0.0
        %1000 = vmatpush1.xpose.msra.mxu0 0.0
        %1001 = vmatprep.subr.mxu0 0.0
        %1002 = vmatpush1.xpose.msra.mxu0 0.0
        %1003 = vmatprep.subr.mxu0 0.0
        %1004 = vmatpush1.xpose.msra.mxu0 0.0
        %1005 = vmatprep.subr.mxu0 0.0
        %1006 = vmatpush1.xpose.msra.mxu0 0.0
        %1007 = vmatprep.subr.mxu0 0.0
        %1008 = vmatpush1.xpose.msra.mxu0 0.0
        %1009 = vmatprep.subr.mxu0 0.0
        %1010 = vmatpush1.xpose.msra.mxu0 0.0
        %1011 = vmatprep.subr.mxu0 0.0
        %1012 = vmatpush1.xpose.msra.mxu0 0.0
        %1013 = vmatprep.subr.mxu0 0.0
        %1014 = vmatpush1.xpose.msra.mxu0 0.0
        %1015 = vmatprep.subr.mxu0 0.0
        %1016 = vmatpush1.xpose.msra.mxu0 0.0
        %1017 = vmatprep.subr.mxu0 0.0
        %1018 = vmatpush1.xpose.msra.mxu0 0.0
        %1019 = vmatprep.subr.mxu0 0.0
        %1020 = vmatpush1.xpose.msra.mxu0 0.0
        %1021 = vmatprep.subr.mxu0 0.0
        %1022 = vmatpush1.xpose.msra.mxu0 0.0
        %1023 = vmatprep.subr.mxu0 0.0
        %1024 = vmatpush1.xpose.msra.mxu0 0.0
        %1025 = vmatprep.subr.mxu0 0.0
        %1026 = vmatpush1.xpose.msra.mxu0 0.0
        %1027 = vmatprep.mubr.f32.mxu0 0.0
        %1028 = vmatmul.mubr.f32.gmra.mrb[0].mxu0 %v961
        %v1029 = vpop.f32.mrb[0].mxu0
        %v1030 = vadd.f32 0.0, %v1029
        %v1031 = vpop.f32.mrb[0].mxu0
        %1032 = vdwg.mxu0
        %1033 = vmatprep.subr.mxu0 0.0
        %1034 = vmatpush1.xpose.msra.mxu0 %v866
        %1035 = vmatprep.subr.mxu0 0.0
        %1036 = vmatpush1.xpose.msra.mxu0 %v868
        %1037 = vmatprep.subr.mxu0 0.0
        %1038 = vmatpush1.xpose.msra.mxu0 %v870
        %1039 = vmatprep.subr.mxu0 0.0
        %1040 = vmatpush1.xpose.msra.mxu0 %v872
        %1041 = vmatprep.subr.mxu0 0.0
        %1042 = vmatpush1.xpose.msra.mxu0 %v874
        %1043 = vmatprep.subr.mxu0 0.0
        %1044 = vmatpush1.xpose.msra.mxu0 %v876
        %1045 = vmatprep.subr.mxu0 0.0
        %1046 = vmatpush1.xpose.msra.mxu0 %v878
        %1047 = vmatprep.subr.mxu0 0.0
        %1048 = vmatpush1.xpose.msra.mxu0 %v880
        %1049 = vmatprep.subr.mxu0 0.0
        %1050 = vmatpush1.xpose.msra.mxu0 %v882
        %1051 = vmatprep.subr.mxu0 0.0
        %1052 = vmatpush1.xpose.msra.mxu0 %v884
        %1053 = vmatprep.subr.mxu0 0.0
        %1054 = vmatpush1.xpose.msra.mxu0 %v886
        %1055 = vmatprep.subr.mxu0 0.0
        %1056 = vmatpush1.xpose.msra.mxu0 %v888
        %1057 = vmatprep.subr.mxu0 0.0
        %1058 = vmatpush1.xpose.msra.mxu0 %v890
        %1059 = vmatprep.subr.mxu0 0.0
        %1060 = vmatpush1.xpose.msra.mxu0 %v892
        %1061 = vmatprep.subr.mxu0 0.0
        %1062 = vmatpush1.xpose.msra.mxu0 %v894
        %1063 = vmatprep.subr.mxu0 0.0
        %1064 = vmatpush1.xpose.msra.mxu0 %v896
        %1065 = vmatprep.subr.mxu0 0.0
        %1066 = vmatpush1.xpose.msra.mxu0 0.0
        %1067 = vmatprep.subr.mxu0 0.0
        %1068 = vmatpush1.xpose.msra.mxu0 0.0
        %1069 = vmatprep.subr.mxu0 0.0
        %1070 = vmatpush1.xpose.msra.mxu0 0.0
        %1071 = vmatprep.subr.mxu0 0.0
        %1072 = vmatpush1.xpose.msra.mxu0 0.0
        %1073 = vmatprep.subr.mxu0 0.0
        %1074 = vmatpush1.xpose.msra.mxu0 0.0
        %1075 = vmatprep.subr.mxu0 0.0
        %1076 = vmatpush1.xpose.msra.mxu0 0.0
        %1077 = vmatprep.subr.mxu0 0.0
        %1078 = vmatpush1.xpose.msra.mxu0 0.0
        %1079 = vmatprep.subr.mxu0 0.0
        %1080 = vmatpush1.xpose.msra.mxu0 0.0
        %1081 = vmatprep.subr.mxu0 0.0
        %1082 = vmatpush1.xpose.msra.mxu0 0.0
        %1083 = vmatprep.subr.mxu0 0.0
        %1084 = vmatpush1.xpose.msra.mxu0 0.0
        %1085 = vmatprep.subr.mxu0 0.0
        %1086 = vmatpush1.xpose.msra.mxu0 0.0
        %1087 = vmatprep.subr.mxu0 0.0
        %1088 = vmatpush1.xpose.msra.mxu0 0.0
        %1089 = vmatprep.subr.mxu0 0.0
        %1090 = vmatpush1.xpose.msra.mxu0 0.0
        %1091 = vmatprep.subr.mxu0 0.0
        %1092 = vmatpush1.xpose.msra.mxu0 0.0
        %1093 = vmatprep.subr.mxu0 0.0
        %1094 = vmatpush1.xpose.msra.mxu0 0.0
        %1095 = vmatprep.subr.mxu0 0.0
        %1096 = vmatpush1.xpose.msra.mxu0 0.0
        %1097 = vmatprep.mubr.f32.mxu0 0.0
        %1098 = vmatmul.mubr.f32.gmra.mrb[0].mxu0 %v962
        %v1099 = vpop.f32.mrb[0].mxu0
        %v1100 = vadd.f32 0.0, %v1099
        %v1101 = vpop.f32.mrb[0].mxu0
        %1102 = vdwg.mxu0
        %v1103 = vrcp.pop %v898
        %v1104 = vrcp.pop %v900
        %v1105 = vrcp.pop %v902
        %v1106 = vrcp.pop %v904
        %v1107 = vrcp.pop %v906
        %v1108 = vrcp.pop %v908
        %v1109 = vrcp.pop %v910
        %v1110 = vrcp.pop %v912
        %v1111 = vrcp.pop %v914
        %v1112 = vrcp.pop %v916
        %v1113 = vrcp.pop %v918
        %v1114 = vrcp.pop %v920
        %v1115 = vrcp.pop %v922
        %v1116 = vrcp.pop %v924
        %v1117 = vrcp.pop %v926
        %v1118 = vrcp.pop %v928
        %v1119 = vrcp.pop %v930
        %v1120 = vrcp.pop %v932
        %v1121 = vrcp.pop %v934
        %v1122 = vrcp.pop %v936
        %v1123 = vrcp.pop %v938
        %v1124 = vrcp.pop %v940
        %v1125 = vrcp.pop %v942
        %v1126 = vrcp.pop %v944
        %v1127 = vrcp.pop %v946
        %v1128 = vrcp.pop %v948
        %v1129 = vrcp.pop %v950
        %v1130 = vrcp.pop %v952
        %v1131 = vrcp.pop %v954
        %v1132 = vrcp.pop %v956
        %v1133 = vrcp.pop %v958
        %v1134 = vrcp.pop %v960
        %v1135 = vmul.f32 %v898, %v1103
        %v1136 = vmul.f32 %v900, %v1104
        %v1137 = vmul.f32 %v902, %v1105
        %v1138 = vmul.f32 %v904, %v1106
        %v1139 = vmul.f32 %v906, %v1107
        %v1140 = vmul.f32 %v908, %v1108
        %v1141 = vmul.f32 %v910, %v1109
        %v1142 = vmul.f32 %v912, %v1110
        %v1143 = vmul.f32 %v914, %v1111
        %v1144 = vmul.f32 %v916, %v1112
        %v1145 = vmul.f32 %v918, %v1113
        %v1146 = vmul.f32 %v920, %v1114
        %v1147 = vmul.f32 %v922, %v1115
        %v1148 = vmul.f32 %v924, %v1116
        %v1149 = vmul.f32 %v926, %v1117
        %v1150 = vmul.f32 %v928, %v1118
        %v1151 = vmul.f32 %v930, %v1119
        %v1152 = vmul.f32 %v932, %v1120
        %v1153 = vmul.f32 %v934, %v1121
        %v1154 = vmul.f32 %v936, %v1122
        %v1155 = vmul.f32 %v938, %v1123
        %v1156 = vmul.f32 %v940, %v1124
        %v1157 = vmul.f32 %v942, %v1125
        %v1158 = vmul.f32 %v944, %v1126
        %v1159 = vmul.f32 %v946, %v1127
        %v1160 = vmul.f32 %v948, %v1128
        %v1161 = vmul.f32 %v950, %v1129
        %v1162 = vmul.f32 %v952, %v1130
        %v1163 = vmul.f32 %v954, %v1131
        %v1164 = vmul.f32 %v956, %v1132
        %v1165 = vmul.f32 %v958, %v1133
        %v1166 = vmul.f32 %v960, %v1134
        %v1167 = vsub.f32 2.0, %v1135
        %v1168 = vsub.f32 2.0, %v1136
        %v1169 = vsub.f32 2.0, %v1137
        %v1170 = vsub.f32 2.0, %v1138
        %v1171 = vsub.f32 2.0, %v1139
        %v1172 = vsub.f32 2.0, %v1140
        %v1173 = vsub.f32 2.0, %v1141
        %v1174 = vsub.f32 2.0, %v1142
        %v1175 = vsub.f32 2.0, %v1143
        %v1176 = vsub.f32 2.0, %v1144
        %v1177 = vsub.f32 2.0, %v1145
        %v1178 = vsub.f32 2.0, %v1146
        %v1179 = vsub.f32 2.0, %v1147
        %v1180 = vsub.f32 2.0, %v1148
        %v1181 = vsub.f32 2.0, %v1149
        %v1182 = vsub.f32 2.0, %v1150
        %v1183 = vsub.f32 2.0, %v1151
        %v1184 = vsub.f32 2.0, %v1152
        %v1185 = vsub.f32 2.0, %v1153
        %v1186 = vsub.f32 2.0, %v1154
        %v1187 = vsub.f32 2.0, %v1155
        %v1188 = vsub.f32 2.0, %v1156
        %v1189 = vsub.f32 2.0, %v1157
        %v1190 = vsub.f32 2.0, %v1158
        %v1191 = vsub.f32 2.0, %v1159
        %v1192 = vsub.f32 2.0, %v1160
        %v1193 = vsub.f32 2.0, %v1161
        %v1194 = vsub.f32 2.0, %v1162
        %v1195 = vsub.f32 2.0, %v1163
        %v1196 = vsub.f32 2.0, %v1164
        %v1197 = vsub.f32 2.0, %v1165
        %v1198 = vsub.f32 2.0, %v1166
        %v1199 = vmul.f32 %v1103, %v1167
        %v1200 = vmul.f32 %v1104, %v1168
        %v1201 = vmul.f32 %v1105, %v1169
        %v1202 = vmul.f32 %v1106, %v1170
        %v1203 = vmul.f32 %v1107, %v1171
        %v1204 = vmul.f32 %v1108, %v1172
        %v1205 = vmul.f32 %v1109, %v1173
        %v1206 = vmul.f32 %v1110, %v1174
        %v1207 = vmul.f32 %v1111, %v1175
        %v1208 = vmul.f32 %v1112, %v1176
        %v1209 = vmul.f32 %v1113, %v1177
        %v1210 = vmul.f32 %v1114, %v1178
        %v1211 = vmul.f32 %v1115, %v1179
        %v1212 = vmul.f32 %v1116, %v1180
        %v1213 = vmul.f32 %v1117, %v1181
        %v1214 = vmul.f32 %v1118, %v1182
        %v1215 = vmul.f32 %v1119, %v1183
        %v1216 = vmul.f32 %v1120, %v1184
        %v1217 = vmul.f32 %v1121, %v1185
        %v1218 = vmul.f32 %v1122, %v1186
        %v1219 = vmul.f32 %v1123, %v1187
        %v1220 = vmul.f32 %v1124, %v1188
        %v1221 = vmul.f32 %v1125, %v1189
        %v1222 = vmul.f32 %v1126, %v1190
        %v1223 = vmul.f32 %v1127, %v1191
        %v1224 = vmul.f32 %v1128, %v1192
        %v1225 = vmul.f32 %v1129, %v1193
        %v1226 = vmul.f32 %v1130, %v1194
        %v1227 = vmul.f32 %v1131, %v1195
        %v1228 = vmul.f32 %v1132, %v1196
        %v1229 = vmul.f32 %v1133, %v1197
        %v1230 = vmul.f32 %v1134, %v1198
        %v1263 = vlaneseq
        %v1264 = vshrl.u32 %v1263, 7
        %v1265 = vsub.s32 %v703, %v1264
        %v1266 = vrot.slane %v1199, %v1265
        %v1267 = vadd.s32 %v703, 4294967288
        %v1268 = vlaneseq
        %v1269 = vshrl.u32 %v1268, 7
        %v1270 = vsub.s32 %v1267, %v1269
        %v1271 = vrot.slane %v1200, %v1270
        %vm1272 = vcmask 130112
        %v1273 = vsel %vm1272, %v1271, %v1266
        %v1274 = vadd.s32 %v703, 4294967280
        %v1275 = vlaneseq
        %v1276 = vshrl.u32 %v1275, 7
        %v1277 = vsub.s32 %v1274, %v1276
        %v1278 = vrot.slane %v1201, %v1277
        %vm1279 = vcmask 195712
        %v1280 = vsel %vm1279, %v1278, %v1273
        %v1281 = vadd.s32 %v703, 4294967272
        %v1282 = vlaneseq
        %v1283 = vshrl.u32 %v1282, 7
        %v1284 = vsub.s32 %v1281, %v1283
        %v1285 = vrot.slane %v1202, %v1284
        %vm1286 = vcmask 261312
        %v1287 = vsel %vm1286, %v1285, %v1280
        %v1288 = vadd.s32 %v703, 4294967264
        %v1289 = vlaneseq
        %v1290 = vshrl.u32 %v1289, 7
        %v1291 = vsub.s32 %v1288, %v1290
        %v1292 = vrot.slane %v1203, %v1291
        %vm1293 = vcmask 326912
        %v1294 = vsel %vm1293, %v1292, %v1287
        %v1295 = vadd.s32 %v703, 4294967256
        %v1296 = vlaneseq
        %v1297 = vshrl.u32 %v1296, 7
        %v1298 = vsub.s32 %v1295, %v1297
        %v1299 = vrot.slane %v1204, %v1298
        %vm1300 = vcmask 392512
        %v1301 = vsel %vm1300, %v1299, %v1294
        %v1302 = vadd.s32 %v703, 4294967248
        %v1303 = vlaneseq
        %v1304 = vshrl.u32 %v1303, 7
        %v1305 = vsub.s32 %v1302, %v1304
        %v1306 = vrot.slane %v1205, %v1305
        %vm1307 = vcmask 458112
        %v1308 = vsel %vm1307, %v1306, %v1301
        %v1309 = vadd.s32 %v703, 4294967240
        %v1310 = vlaneseq
        %v1311 = vshrl.u32 %v1310, 7
        %v1312 = vsub.s32 %v1309, %v1311
        %v1313 = vrot.slane %v1206, %v1312
        %vm1314 = vcmask 523712
        %v1315 = vsel %vm1314, %v1313, %v1308
        %v1316 = vadd.s32 %v703, 4294967232
        %v1317 = vlaneseq
        %v1318 = vshrl.u32 %v1317, 7
        %v1319 = vsub.s32 %v1316, %v1318
        %v1320 = vrot.slane %v1207, %v1319
        %vm1321 = vcmask 589312
        %v1322 = vsel %vm1321, %v1320, %v1315
        %v1323 = vadd.s32 %v703, 4294967224
        %v1324 = vlaneseq
        %v1325 = vshrl.u32 %v1324, 7
        %v1326 = vsub.s32 %v1323, %v1325
        %v1327 = vrot.slane %v1208, %v1326
        %vm1328 = vcmask 654912
        %v1329 = vsel %vm1328, %v1327, %v1322
        %v1330 = vadd.s32 %v703, 4294967216
        %v1331 = vlaneseq
        %v1332 = vshrl.u32 %v1331, 7
        %v1333 = vsub.s32 %v1330, %v1332
        %v1334 = vrot.slane %v1209, %v1333
        %vm1335 = vcmask 720512
        %v1336 = vsel %vm1335, %v1334, %v1329
        %v1337 = vadd.s32 %v703, 4294967208
        %v1338 = vlaneseq
        %v1339 = vshrl.u32 %v1338, 7
        %v1340 = vsub.s32 %v1337, %v1339
        %v1341 = vrot.slane %v1210, %v1340
        %vm1342 = vcmask 786112
        %v1343 = vsel %vm1342, %v1341, %v1336
        %v1344 = vadd.s32 %v703, 4294967200
        %v1345 = vlaneseq
        %v1346 = vshrl.u32 %v1345, 7
        %v1347 = vsub.s32 %v1344, %v1346
        %v1348 = vrot.slane %v1211, %v1347
        %vm1349 = vcmask 851712
        %v1350 = vsel %vm1349, %v1348, %v1343
        %v1351 = vadd.s32 %v703, 4294967192
        %v1352 = vlaneseq
        %v1353 = vshrl.u32 %v1352, 7
        %v1354 = vsub.s32 %v1351, %v1353
        %v1355 = vrot.slane %v1212, %v1354
        %vm1356 = vcmask 917312
        %v1357 = vsel %vm1356, %v1355, %v1350
        %v1358 = vadd.s32 %v703, 4294967184
        %v1359 = vlaneseq
        %v1360 = vshrl.u32 %v1359, 7
        %v1361 = vsub.s32 %v1358, %v1360
        %v1362 = vrot.slane %v1213, %v1361
        %vm1363 = vcmask 982912
        %v1364 = vsel %vm1363, %v1362, %v1357
        %v1365 = vadd.s32 %v703, 4294967176
        %v1366 = vlaneseq
        %v1367 = vshrl.u32 %v1366, 7
        %v1368 = vsub.s32 %v1365, %v1367
        %v1369 = vrot.slane %v1214, %v1368
        %vm1370 = vcmask 1048512
        %v1371 = vsel %vm1370, %v1369, %v1364
        %v1372 = vlaneseq
        %v1373 = vshrl.u32 %v1372, 7
        %v1374 = vsub.s32 %v703, %v1373
        %v1375 = vrot.slane %v1215, %v1374
        %v1376 = vlaneseq
        %v1377 = vshrl.u32 %v1376, 7
        %v1378 = vsub.s32 %v1267, %v1377
        %v1379 = vrot.slane %v1216, %v1378
        %v1380 = vsel %vm1272, %v1379, %v1375
        %v1381 = vlaneseq
        %v1382 = vshrl.u32 %v1381, 7
        %v1383 = vsub.s32 %v1274, %v1382
        %v1384 = vrot.slane %v1217, %v1383
        %v1385 = vsel %vm1279, %v1384, %v1380
        %v1386 = vlaneseq
        %v1387 = vshrl.u32 %v1386, 7
        %v1388 = vsub.s32 %v1281, %v1387
        %v1389 = vrot.slane %v1218, %v1388
        %v1390 = vsel %vm1286, %v1389, %v1385
        %v1391 = vlaneseq
        %v1392 = vshrl.u32 %v1391, 7
        %v1393 = vsub.s32 %v1288, %v1392
        %v1394 = vrot.slane %v1219, %v1393
        %v1395 = vsel %vm1293, %v1394, %v1390
        %v1396 = vlaneseq
        %v1397 = vshrl.u32 %v1396, 7
        %v1398 = vsub.s32 %v1295, %v1397
        %v1399 = vrot.slane %v1220, %v1398
        %v1400 = vsel %vm1300, %v1399, %v1395
        %v1401 = vlaneseq
        %v1402 = vshrl.u32 %v1401, 7
        %v1403 = vsub.s32 %v1302, %v1402
        %v1404 = vrot.slane %v1221, %v1403
        %v1405 = vsel %vm1307, %v1404, %v1400
        %v1406 = vlaneseq
        %v1407 = vshrl.u32 %v1406, 7
        %v1408 = vsub.s32 %v1309, %v1407
        %v1409 = vrot.slane %v1222, %v1408
        %v1410 = vsel %vm1314, %v1409, %v1405
        %v1411 = vlaneseq
        %v1412 = vshrl.u32 %v1411, 7
        %v1413 = vsub.s32 %v1316, %v1412
        %v1414 = vrot.slane %v1223, %v1413
        %v1415 = vsel %vm1321, %v1414, %v1410
        %v1416 = vlaneseq
        %v1417 = vshrl.u32 %v1416, 7
        %v1418 = vsub.s32 %v1323, %v1417
        %v1419 = vrot.slane %v1224, %v1418
        %v1420 = vsel %vm1328, %v1419, %v1415
        %v1421 = vlaneseq
        %v1422 = vshrl.u32 %v1421, 7
        %v1423 = vsub.s32 %v1330, %v1422
        %v1424 = vrot.slane %v1225, %v1423
        %v1425 = vsel %vm1335, %v1424, %v1420
        %v1426 = vlaneseq
        %v1427 = vshrl.u32 %v1426, 7
        %v1428 = vsub.s32 %v1337, %v1427
        %v1429 = vrot.slane %v1226, %v1428
        %v1430 = vsel %vm1342, %v1429, %v1425
        %v1431 = vlaneseq
        %v1432 = vshrl.u32 %v1431, 7
        %v1433 = vsub.s32 %v1344, %v1432
        %v1434 = vrot.slane %v1227, %v1433
        %v1435 = vsel %vm1349, %v1434, %v1430
        %v1436 = vlaneseq
        %v1437 = vshrl.u32 %v1436, 7
        %v1438 = vsub.s32 %v1351, %v1437
        %v1439 = vrot.slane %v1228, %v1438
        %v1440 = vsel %vm1356, %v1439, %v1435
        %v1441 = vlaneseq
        %v1442 = vshrl.u32 %v1441, 7
        %v1443 = vsub.s32 %v1358, %v1442
        %v1444 = vrot.slane %v1229, %v1443
        %v1445 = vsel %vm1363, %v1444, %v1440
        %v1446 = vlaneseq
        %v1447 = vshrl.u32 %v1446, 7
        %v1448 = vsub.s32 %v1365, %v1447
        %v1449 = vrot.slane %v1230, %v1448
        %v1450 = vsel %vm1370, %v1449, %v1445
        %vm1451 = vcmask 1042434
        %v1452 = vsel %vm1451, %v1371, %v1371
        %vm1453 = vcmask 1043459
        %v1454 = vsel %vm1453, %v1371, %v1452
        %vm1455 = vcmask 1044484
        %v1456 = vsel %vm1455, %v1371, %v1454
        %vm1457 = vcmask 1045509
        %v1458 = vsel %vm1457, %v1371, %v1456
        %vm1459 = vcmask 1046534
        %v1460 = vsel %vm1459, %v1371, %v1458
        %vm1461 = vcmask 1047559
        %v1462 = vsel %vm1461, %v1371, %v1460
        %v1463 = vsel %vm1451, %v1450, %v1450
        %v1464 = vsel %vm1453, %v1450, %v1463
        %v1465 = vsel %vm1455, %v1450, %v1464
        %v1466 = vsel %vm1457, %v1450, %v1465
        %v1467 = vsel %vm1459, %v1450, %v1466
        %v1468 = vsel %vm1461, %v1450, %v1467
        %v1471 = vmul.f32 %v1030, %v1462
        %v1472 = vmul.f32 %v1100, %v1468
        %1473 = vst [vmem:[%s223] sm:$0xff] %v1471
        %1474 = vst [vmem:[%s223 + $0x8] sm:$0xff] %v1472
        %s1475 = sand.u32 %s119, 1
        %s1476 = scalar_lea.sflag [#allocation3], %s1475
        %s1477 = sand.u32 %s119, 1
        %s1478 = smul.addr %s1477, 16
        %s1479 = scalar_lea.vmem [#allocation2], %s1478
        // Predicated region
        $region33: #{tpu_custom_call.1} parent=31 // pred_check
          %p1480 = pneg %p129
        $region34: #{tpu_custom_call.1} parent=31 // pred_check_branch
          %1482 = sbr.rel (%p1480) target = $region36
        $region35: #{tpu_custom_call.1} parent=31 // pred_region
          %s1483 = smul.u32 2, %s21
          %s1485 = ssub.s32 256, 256
          %1486 = vsyncadd %s1476, %s1485
          %s1487 = sadd.s32 %s22, %s1483
          %s1488 = smul.addr %s1487, 128
          %s1489 = scalar_lea.hbm %s3, %s1488
          %s1490 = sshll.u32 %s1479, 4
          %s1491 = int_to_ptr.vmem [resolvable:$true] %s1490
          %1496 = dma.vmem_to_hbm [thread:$0]  %s1491, 256, %s1489, %s1476, 128, 128, 8
        $region36: #{tpu_custom_call.1} parent=31 // pred_fallthru
          _
      $region32: #{tpu_custom_call.1} parent=5 // pred_fallthru
        _
      %p1497 = scmp.le.s32.totalorder 2, %s12
      // Predicated region
      $region37: #{tpu_custom_call.1} parent=5 // pred_check
        %p1498 = pneg %p1497
      $region38: #{tpu_custom_call.1} parent=5 // pred_check_branch
        %1500 = sbr.rel (%p1498) target = $region40
      $region39: #{tpu_custom_call.1} parent=5 // pred_region
        %s1501 = ssub.s32 %s12, 2
        // Predicated region
        $region41: #{tpu_custom_call.1} parent=39 // pred_check
          %p1502 = pneg %p135
        $region42: #{tpu_custom_call.1} parent=39 // pred_check_branch
          %1504 = sbr.rel (%p1502) target = $region44
        $region43: #{tpu_custom_call.1} parent=39 // pred_region
          %s1505 = sand.u32 %s120, 1
          %s1506 = scalar_lea.sflag [#allocation3], %s1505
          %s1507 = sand.u32 %s120, 1
          %s1508 = smul.addr %s1507, 16
          %s1509 = scalar_lea.vmem [#allocation2], %s1508
          %1510 = dma.done %s1506, 256
        $region44: #{tpu_custom_call.1} parent=39 // pred_fallthru
          _
      $region40: #{tpu_custom_call.1} parent=5 // pred_fallthru
        _
    $region6: #{tpu_custom_call.1} parent=1 // loop_footer
      %s16 = sadd.s32 1, %s12
    $region7: #{tpu_custom_call.1} parent=1 // loop_footer_branch
      %11 = sbr.rel target = $region3
    $region8: #{tpu_custom_call.1} parent=1 // loop_exit
      _
    %1511 = vsyncpa [#allocation3], 1
    %s1512 = scalar_lea.sflag [#allocation3], 1
    %1513 = vsyncpa %s1512, 1

</llo_original>
